<compile_context>
chip_gen: v5e
topology: v5e:2x2
jax: 0.10.0
libtpu: 0.0.40
codegen_flags: <defaults>
</compile_context>

<pallas_src>
import functools

import jax
import jax.numpy as jnp
from jax.experimental import pallas as pl
from jax.experimental.pallas import tpu as pltpu

DROPOUT_RATE = 0.2
LANE = 128                      # vreg lane width: feature dims padded to multiples of this
SUB = 8                         # vreg sublane width: node (row) dims padded to multiples of this
COMPUTE_DTYPE = jnp.bfloat16    # MXU input dtype; accumulation is always f32


def _round_up(x, m):
    return (x + m - 1) // m * m


def _pad_nodes(n):
    # Rows: multiple of 8; once several 128-row tiles are needed, round to 128 so the
    # dst-tile grid axis divides evenly.
    return _round_up(n, LANE) if n >= LANE else _round_up(n, SUB)


def _pad2(x, rows, cols):
    return jnp.pad(x, ((0, rows - x.shape[0]), (0, cols - x.shape[1])))


# ----------------------------------------------------------------------------
# Fused kernel: per-dst-type SAGEConv over all relations + sum + ReLU(+dropout)
# ----------------------------------------------------------------------------
def _fused_sage_kernel(a_ref, xs_ref, wn_ref, xd_ref, ws_ref, b_ref, *rest,
                       dropout_rate):
    if dropout_rate > 0.0:
        bits_ref, o_ref, acc_ref = rest
    else:
        (o_ref, acc_ref), bits_ref = rest, None

    r = pl.program_id(1)

    @pl.when(r == 0)
    def _init():
        # Self path + bias, pre-summed over relations (aggregate='sum' algebra):
        # computed once per dst tile instead of once per relation.
        acc_ref[...] = (
            jnp.dot(xd_ref[...], ws_ref[...], preferred_element_type=jnp.float32)
            + b_ref[...]
        )

    # Neighbor ('mean') path, reassociated as A_norm @ (X_src @ W_neigh) so the large
    # adjacency contraction runs against an f_out-wide panel.
    xw = jnp.dot(xs_ref[0], wn_ref[0], preferred_element_type=jnp.float32)
    acc_ref[...] += jnp.dot(a_ref[0], xw.astype(a_ref.dtype),
                            preferred_element_type=jnp.float32)

    @pl.when(r == pl.num_programs(1) - 1)
    def _finalize():
        h = jnp.maximum(acc_ref[...], 0.0)                     # ReLU, f32 epilogue
        if dropout_rate > 0.0:
            # Inverted dropout: compare raw uint32 bits against an integer threshold.
            threshold = jnp.uint32(int(dropout_rate * 4294967296.0))
            keep = bits_ref[...] >= threshold
            h = jnp.where(keep, h * (1.0 / (1.0 - dropout_rate)), 0.0)
        o_ref[...] = h                                         # lane-dense f32 store


def fused_sage_conv(a_stack, xs_stack, wn_stack, x_dst, w_self_sum, b_sum,
                    dropout_bits=None, dropout_rate=0.0):
    """HeteroGraphConv(SAGEConv 'mean', aggregate='sum') for one dst node type,
    fused with the ReLU(+dropout) epilogue."""
    num_rel, n_dst_p, n_src_p = a_stack.shape
    f_in_p = x_dst.shape[1]
    f_out_p = w_self_sum.shape[1]
    tm = min(n_dst_p, LANE)          # dst-row tile; "parallel" axis (shards across TCs on v7x)
    grid = (n_dst_p // tm, num_rel)  # relation axis = reduction, kept last

    in_specs = [
        pl.BlockSpec((1, tm, n_src_p), lambda m, r: (r, m, 0)),       # A_norm[r] tile
        pl.BlockSpec((1, n_src_p, f_in_p), lambda m, r: (r, 0, 0)),   # X_src[r]
        pl.BlockSpec((1, f_in_p, f_out_p), lambda m, r: (r, 0, 0)),   # W_neigh[r]
        pl.BlockSpec((tm, f_in_p), lambda m, r: (m, 0)),              # X_dst tile
        pl.BlockSpec((f_in_p, f_out_p), lambda m, r: (0, 0)),         # sum_r W_self_r
        pl.BlockSpec((1, f_out_p), lambda m, r: (0, 0)),              # sum_r b_r
    ]
    args = [a_stack, xs_stack, wn_stack, x_dst, w_self_sum, b_sum]
    if dropout_rate > 0.0:
        in_specs.append(pl.BlockSpec((tm, f_out_p), lambda m, r: (m, 0)))  # dropout bits
        args.append(dropout_bits)

    return pl.pallas_call(
        functools.partial(_fused_sage_kernel, dropout_rate=dropout_rate),
        grid=grid,
        in_specs=in_specs,
        out_specs=pl.BlockSpec((tm, f_out_p), lambda m, r: (m, 0)),
        out_shape=jax.ShapeDtypeStruct((n_dst_p, f_out_p), jnp.float32),
        scratch_shapes=[pltpu.VMEM((tm, f_out_p), jnp.float32)],
        compiler_params=pltpu.CompilerParams(
            dimension_semantics=("parallel", "arbitrary"),
            vmem_limit_bytes=32 * 1024 * 1024,   # explicit; safe on v5e/v6e/v7x
        ),
    )(*args)


# ----------------------------------------------------------------------------
# Graph / parameter preparation and the full SAGELayer forward
# ----------------------------------------------------------------------------
def prepare_hetero_graph(adjs, rel_meta):
    """Group relations by destination type; pad + stack their normalized adjacencies."""
    n_nodes = {}
    by_dst = {}
    for rel, (src_t, dst_t) in rel_meta.items():
        n_dst, n_src = adjs[rel].shape
        n_nodes[dst_t] = n_dst
        n_nodes[src_t] = n_src
        by_dst.setdefault(dst_t, []).append((rel, src_t))

    graph = {}
    for dst_t, rels in sorted(by_dst.items()):
        n_dst_p = _pad_nodes(n_nodes[dst_t])
        n_src_p = max(_pad_nodes(n_nodes[s]) for _, s in rels)
        a_stack = jnp.stack(
            [_pad2(adjs[rel], n_dst_p, n_src_p) for rel, _ in rels], axis=0)
        graph[dst_t] = dict(rels=rels, a_stack=a_stack.astype(COMPUTE_DTYPE),
                            n_dst_p=n_dst_p, n_src_p=n_src_p)
    return graph, n_nodes


def hetero_sage_layer(graph, feats, params, f_in, f_out, *,
                      dropout_rate=0.0, dropout_key=None):
    """One HeteroGraphConv layer (+ ReLU [+Dropout]).  `feats` values may already be
    padded; outputs are (n_dst_padded, f_out_padded) f32 with exactly-zero padding."""
    f_in_p = _round_up(f_in, LANE)
    f_out_p = _round_up(f_out, LANE)
    out = {}
    for i, (dst_t, g) in enumerate(sorted(graph.items())):
        # DGL skips relations whose source type has no input features.
        keep = [j for j, (_, s) in enumerate(g["rels"]) if s in feats]
        if not keep:
            continue
        rels = [g["rels"][j] for j in keep]
        a_stack = (g["a_stack"] if len(keep) == len(g["rels"])
                   else g["a_stack"][jnp.asarray(keep)])

        # Per-relation neighbor weights (stacked, padded); self weights / biases pre-summed.
        wn = jnp.stack([_pad2(params[rel]["w_neigh"], f_in_p, f_out_p)
                        for rel, _ in rels], axis=0).astype(COMPUTE_DTYPE)
        ws_sum = sum(_pad2(params[rel]["w_self"], f_in_p, f_out_p)
                     for rel, _ in rels).astype(COMPUTE_DTYPE)
        b_sum = sum(params[rel]["bias"] for rel, _ in rels)
        b_sum = jnp.pad(b_sum, (0, f_out_p - f_out)).reshape(1, f_out_p).astype(jnp.float32)

        xs = jnp.stack([_pad2(feats[s], g["n_src_p"], f_in_p)
                        for _, s in rels], axis=0).astype(COMPUTE_DTYPE)
        xd = _pad2(feats[dst_t], g["n_dst_p"], f_in_p).astype(COMPUTE_DTYPE)

        bits = None
        if dropout_rate > 0.0:
            # Decorrelated per-dst-type streams via fold_in; thresholding happens in-kernel.
            bits = jax.random.bits(jax.random.fold_in(dropout_key, i),
                                   (g["n_dst_p"], f_out_p), dtype=jnp.uint32)

        out[dst_t] = fused_sage_conv(a_stack, xs, wn, xd, ws_sum, b_sum,
                                     dropout_bits=bits, dropout_rate=dropout_rate)
    return out


def sage_layer_forward(graph, n_nodes, inputs, params1, params2,
                       in_feats, hid_feats, out_feats, dropout_key):
    # conv1 -> ReLU -> Dropout(0.2)   (all fused per dst type)
    h = hetero_sage_layer(graph, inputs, params1, in_feats, hid_feats,
                          dropout_rate=DROPOUT_RATE, dropout_key=dropout_key)
    # conv2 -> ReLU.  Layer-1 outputs stay padded: padded rows contribute nothing
    # (zero adjacency columns) and padded feature columns are exactly zero.
    h = hetero_sage_layer(graph, h, params2, hid_feats, out_feats)
    # Strip padding back to the true per-type shapes.
    return {t: v[: n_nodes[t], :out_feats] for t, v in h.items()}


# ----------------------------------------------------------------------------
# Deterministic parameter / graph construction
# ----------------------------------------------------------------------------
def init_sage_params(key, rel_names, f_in, f_out):
    params = {}
    for rel in rel_names:
        key, k1, k2 = jax.random.split(key, 3)
        params[rel] = dict(
            w_neigh=jax.random.normal(k1, (f_in, f_out), jnp.float32) * 0.1,
            w_self=jax.random.normal(k2, (f_in, f_out), jnp.float32) * 0.1,
            bias=jnp.zeros((f_out,), jnp.float32),  # DGL SAGEConv bias init = zeros
        )
    return params, key


def make_norm_adj(key, n_dst, n_src, p=0.3):
    a = (jax.random.uniform(key, (n_dst, n_src)) < p).astype(jnp.float32)
    deg = jnp.maximum(a.sum(axis=1, keepdims=True), 1.0)  # zero in-degree -> zero rows
    return a / deg


if __name__ == "__main__":
    key = jax.random.PRNGKey(0)

    # small hetero graph: 2 node types, 3 relations
    n_nodes = {"a": 16, "b": 16}
    rel_meta = {"r1": ("a", "a"), "r2": ("a", "b"), "r3": ("b", "a")}
    in_feats, hid_feats, out_feats = 32, 32, 16

    key, ka, kb = jax.random.split(key, 3)
    inputs = {
        "a": jax.random.normal(ka, (n_nodes["a"], in_feats), jnp.float32),
        "b": jax.random.normal(kb, (n_nodes["b"], in_feats), jnp.float32),
    }

    adjs = {}
    for rel, (src_t, dst_t) in rel_meta.items():
        key, kk = jax.random.split(key)
        adjs[rel] = make_norm_adj(kk, n_nodes[dst_t], n_nodes[src_t])

    params1, key = init_sage_params(key, list(rel_meta), in_feats, hid_feats)
    params2, key = init_sage_params(key, list(rel_meta), hid_feats, out_feats)
    key, dropout_key = jax.random.split(key)

    graph, n_nodes_derived = prepare_hetero_graph(adjs, rel_meta)
    out = sage_layer_forward(graph, n_nodes, inputs, params1, params2,
                             in_feats, hid_feats, out_feats, dropout_key)
    out = jax.tree_util.tree_map(jax.block_until_ready, out)

    assert out["a"].shape == (n_nodes["a"], out_feats)
    assert out["b"].shape == (n_nodes["b"], out_feats)
    assert all(bool(jnp.all(v >= 0.0)) for v in out.values())  # post-ReLU
    print("KERNEL_OK")
</pallas_src>

<mosaic_0001>
module attributes {stable_mosaic.version = 11 : i64} {
  func.func @_fused_sage_kernel(%arg0: i32, %arg1: i32, %arg2: memref<1x16x16xbf16, #tpu.memory_space<vmem>>, %arg3: memref<1x16x128xbf16, #tpu.memory_space<vmem>>, %arg4: memref<1x128x128xbf16, #tpu.memory_space<vmem>>, %arg5: memref<16x128xbf16, #tpu.memory_space<vmem>>, %arg6: memref<128x128xbf16, #tpu.memory_space<vmem>>, %arg7: memref<1x128xf32, #tpu.memory_space<vmem>>, %arg8: memref<16x128xi32, #tpu.memory_space<vmem>>, %arg9: memref<16x128xf32, #tpu.memory_space<vmem>>, %arg10: memref<16x128xf32, #tpu.memory_space<vmem>>) attributes {dimension_semantics = [#tpu.dimension_semantics<parallel>, #tpu.dimension_semantics<arbitrary>], iteration_bounds = array<i64: 1, 2>, scalar_prefetch = 0 : i64, scratch_operands = 1 : i64, tpu.core_type = #tpu.core_type<tc>, window_params = [{transform_indices = @transform_0, window_bounds = array<i64: 1, 16, 16>}, {transform_indices = @transform_1, window_bounds = array<i64: 1, 16, 128>}, {transform_indices = @transform_2, window_bounds = array<i64: 1, 128, 128>}, {transform_indices = @transform_3, window_bounds = array<i64: 16, 128>}, {pipeline_mode = #tpu.pipeline_mode<synchronous>, transform_indices = @transform_4, window_bounds = array<i64: 128, 128>}, {pipeline_mode = #tpu.pipeline_mode<synchronous>, transform_indices = @transform_5, window_bounds = array<i64: 1, 128>}, {transform_indices = @transform_6, window_bounds = array<i64: 16, 128>}, {transform_indices = @transform_7, window_bounds = array<i64: 16, 128>}]} {
    %c0_i32 = arith.constant 0 : i32
    %0 = arith.cmpi eq, %arg1, %c0_i32 : i32
    %1 = arith.extui %0 : i1 to i32
    %c0_i32_0 = arith.constant 0 : i32
    %2 = arith.cmpi ne, %1, %c0_i32_0 : i32
    scf.if %2 {
      %c0_15 = arith.constant 0 : index
      %c0_16 = arith.constant 0 : index
      %18 = vector.load %arg5[%c0_15, %c0_16] : memref<16x128xbf16, #tpu.memory_space<vmem>>, vector<16x128xbf16>
      %c0_17 = arith.constant 0 : index
      %c0_18 = arith.constant 0 : index
      %19 = vector.load %arg6[%c0_17, %c0_18] : memref<128x128xbf16, #tpu.memory_space<vmem>>, vector<128x128xbf16>
      %cst_19 = arith.constant dense<0.000000e+00> : vector<16x128xf32>
      %20 = tpu.matmul %18, %19, %cst_19 {dimension_numbers = #tpu.dot_dimension_numbers<[1], [0], [0], [1], [0, 0, 1, 1], [], []>} : vector<16x128xbf16>, vector<128x128xbf16>, vector<16x128xf32> -> vector<16x128xf32>
      %c0_20 = arith.constant 0 : index
      %c0_21 = arith.constant 0 : index
      %21 = vector.load %arg7[%c0_20, %c0_21] : memref<1x128xf32, #tpu.memory_space<vmem>>, vector<1x128xf32>
      %22 = vector.broadcast %21 : vector<1x128xf32> to vector<16x128xf32>
      %23 = arith.addf %20, %22 : vector<16x128xf32>
      %c0_22 = arith.constant 0 : index
      %c0_23 = arith.constant 0 : index
      %24 = vector.load %arg10[%c0_22, %c0_23] : memref<16x128xf32, #tpu.memory_space<vmem>>, vector<16x128xf32>
      tpu.vector_store %arg10[%c0_22, %c0_23], %23 {strides = array<i32>} : memref<16x128xf32, #tpu.memory_space<vmem>>, vector<16x128xf32>,
    } else {
    }
    %c0 = arith.constant 0 : index
    %c0_1 = arith.constant 0 : index
    %c0_2 = arith.constant 0 : index
    %3 = vector.load %arg3[%c0, %c0_1, %c0_2] : memref<1x16x128xbf16, #tpu.memory_space<vmem>>, vector<1x16x128xbf16>
    %4 = vector.shape_cast %3 : vector<1x16x128xbf16> to vector<16x128xbf16>
    %c0_3 = arith.constant 0 : index
    %c0_4 = arith.constant 0 : index
    %c0_5 = arith.constant 0 : index
    %5 = vector.load %arg4[%c0_3, %c0_4, %c0_5] : memref<1x128x128xbf16, #tpu.memory_space<vmem>>, vector<1x128x128xbf16>
    %6 = vector.shape_cast %5 : vector<1x128x128xbf16> to vector<128x128xbf16>
    %cst = arith.constant dense<0.000000e+00> : vector<16x128xf32>
    %7 = tpu.matmul %4, %6, %cst {dimension_numbers = #tpu.dot_dimension_numbers<[1], [0], [0], [1], [0, 0, 1, 1], [], []>} : vector<16x128xbf16>, vector<128x128xbf16>, vector<16x128xf32> -> vector<16x128xf32>
    %c0_6 = arith.constant 0 : index
    %c0_7 = arith.constant 0 : index
    %8 = vector.load %arg10[%c0_6, %c0_7] : memref<16x128xf32, #tpu.memory_space<vmem>>, vector<16x128xf32>
    %c0_8 = arith.constant 0 : index
    %c0_9 = arith.constant 0 : index
    %c0_10 = arith.constant 0 : index
    %9 = vector.load %arg2[%c0_8, %c0_9, %c0_10] : memref<1x16x16xbf16, #tpu.memory_space<vmem>>, vector<1x16x16xbf16>
    %10 = vector.shape_cast %9 : vector<1x16x16xbf16> to vector<16x16xbf16>
    %11 = arith.truncf %7 : vector<16x128xf32> to vector<16x128xbf16>
    %cst_11 = arith.constant dense<0.000000e+00> : vector<16x128xf32>
    %12 = tpu.matmul %10, %11, %cst_11 {dimension_numbers = #tpu.dot_dimension_numbers<[1], [0], [0], [1], [0, 0, 1, 1], [], []>} : vector<16x16xbf16>, vector<16x128xbf16>, vector<16x128xf32> -> vector<16x128xf32>
    %13 = arith.addf %8, %12 : vector<16x128xf32>
    %c0_12 = arith.constant 0 : index
    %c0_13 = arith.constant 0 : index
    %14 = vector.load %arg10[%c0_12, %c0_13] : memref<16x128xf32, #tpu.memory_space<vmem>>, vector<16x128xf32>
    tpu.vector_store %arg10[%c0_12, %c0_13], %13 {strides = array<i32>} : memref<16x128xf32, #tpu.memory_space<vmem>>, vector<16x128xf32>,
    %c1_i32 = arith.constant 1 : i32
    %15 = arith.cmpi eq, %arg1, %c1_i32 : i32
    %16 = arith.extui %15 : i1 to i32
    %c0_i32_14 = arith.constant 0 : i32
    %17 = arith.cmpi ne, %16, %c0_i32_14 : i32
    scf.if %17 {
      %c0_15 = arith.constant 0 : index
      %c0_16 = arith.constant 0 : index
      %18 = vector.load %arg10[%c0_15, %c0_16] : memref<16x128xf32, #tpu.memory_space<vmem>>, vector<16x128xf32>
      %cst_17 = arith.constant 0.000000e+00 : f32
      %19 = vector.broadcast %cst_17 : f32 to vector<16x128xf32>
      %20 = arith.maximumf %18, %19 : vector<16x128xf32>
      %c0_18 = arith.constant 0 : index
      %c0_19 = arith.constant 0 : index
      %21 = vector.load %arg8[%c0_18, %c0_19] : memref<16x128xi32, #tpu.memory_space<vmem>>, vector<16x128xi32>
      %c858993459_i32 = arith.constant 858993459 : i32
      %22 = vector.broadcast %c858993459_i32 : i32 to vector<16x128xi32>
      %23 = arith.cmpi uge, %21, %22 : vector<16x128xi32>
      %cst_20 = arith.constant 1.250000e+00 : f32
      %24 = vector.broadcast %cst_20 : f32 to vector<16x128xf32>
      %25 = arith.mulf %20, %24 : vector<16x128xf32>
      %cst_21 = arith.constant 0.000000e+00 : f32
      %26 = vector.broadcast %cst_21 : f32 to vector<16x128xf32>
      %27 = arith.select %23, %25, %26 : vector<16x128xi1>, vector<16x128xf32>
      %c0_22 = arith.constant 0 : index
      %c0_23 = arith.constant 0 : index
      %28 = vector.load %arg9[%c0_22, %c0_23] : memref<16x128xf32, #tpu.memory_space<vmem>>, vector<16x128xf32>
      tpu.vector_store %arg9[%c0_22, %c0_23], %27 {strides = array<i32>} : memref<16x128xf32, #tpu.memory_space<vmem>>, vector<16x128xf32>,
    } else {
    }
    return
  }
  func.func @transform_0(%arg0: i32, %arg1: i32) -> (i32, i32, i32) {
    %c0_i32 = arith.constant 0 : i32
    %c0_i32_0 = arith.constant 0 : i32
    return %arg1, %arg0, %c0_i32 : i32, i32, i32
  }
  func.func @transform_1(%arg0: i32, %arg1: i32) -> (i32, i32, i32) {
    %c0_i32 = arith.constant 0 : i32
    %c0_i32_0 = arith.constant 0 : i32
    %c0_i32_1 = arith.constant 0 : i32
    return %arg1, %c0_i32, %c0_i32_0 : i32, i32, i32
  }
  func.func @transform_2(%arg0: i32, %arg1: i32) -> (i32, i32, i32) {
    %c0_i32 = arith.constant 0 : i32
    %c0_i32_0 = arith.constant 0 : i32
    %c0_i32_1 = arith.constant 0 : i32
    return %arg1, %c0_i32, %c0_i32_0 : i32, i32, i32
  }
  func.func @transform_3(%arg0: i32, %arg1: i32) -> (i32, i32) {
    %c0_i32 = arith.constant 0 : i32
    %c0_i32_0 = arith.constant 0 : i32
    return %arg0, %c0_i32 : i32, i32
  }
  func.func @transform_4(%arg0: i32, %arg1: i32) -> (i32, i32) {
    %c0_i32 = arith.constant 0 : i32
    %c0_i32_0 = arith.constant 0 : i32
    %c0_i32_1 = arith.constant 0 : i32
    return %c0_i32, %c0_i32_0 : i32, i32
  }
  func.func @transform_5(%arg0: i32, %arg1: i32) -> (i32, i32) {
    %c0_i32 = arith.constant 0 : i32
    %c0_i32_0 = arith.constant 0 : i32
    %c0_i32_1 = arith.constant 0 : i32
    return %c0_i32, %c0_i32_0 : i32, i32
  }
  func.func @transform_6(%arg0: i32, %arg1: i32) -> (i32, i32) {
    %c0_i32 = arith.constant 0 : i32
    %c0_i32_0 = arith.constant 0 : i32
    return %arg0, %c0_i32 : i32, i32
  }
  func.func @transform_7(%arg0: i32, %arg1: i32) -> (i32, i32) {
    %c0_i32 = arith.constant 0 : i32
    %c0_i32_0 = arith.constant 0 : i32
    return %arg0, %c0_i32 : i32, i32
  }
}

</mosaic_0001>

<llo_original>
// kernel: tpu_custom_call.1
$region0: #{tpu_custom_call.1}
  #allocation0 [shape = 'u32[]', space=smem, size = 0x4, offset = 0x4, fixed_abs, tag = 'smem constant byte address 0x4 - core index']
  #allocation1 [shape = 'u32[72,128]{1,0:T(1,128)}', space=vmem, size = 0x9000, scoped, tag = 'internal scratch']
  #allocation2 [shape = 'f32[16,128]{1,0:T(8,128)}', space=vmem, size = 0x2000, scoped, tag = 'scratch operand']
  %s0 = inlined_call_operand.hbm [shape: bf16[2,16,16], index: 0, kind: input, shape index: {}]
  %s1 = inlined_call_operand.hbm [shape: bf16[2,16,128], index: 1, kind: input, shape index: {}]
  %s2 = inlined_call_operand.hbm [shape: bf16[2,128,128], index: 2, kind: input, shape index: {}]
  %s3 = inlined_call_operand.hbm [shape: bf16[16,128], index: 3, kind: input, shape index: {}]
  %s4 = inlined_call_operand.hbm [shape: bf16[128,128], index: 4, kind: input, shape index: {}]
  %s5 = inlined_call_operand.vmem [shape: f32[1,128], index: 5, kind: input, shape index: {}]
  %s6 = inlined_call_operand.hbm [shape: u32[16,128], index: 6, kind: input, shape index: {}]
  %s7 = inlined_call_operand.hbm [shape: f32[16,128], index: 7, kind: output, shape index: {}]
  %s8 = sld [smem:[#allocation0]]
  $region93: #{tpu_custom_call.1} parent=0
    _
  %s10 = ssub.s32 1, %s8
  %s11 = scalar_select 0, %s10, %s8
  $region1: #{tpu_custom_call.1} parent=0
    #allocation3 [shape = 'u8[8192]{0}', space=vmem, size = 0x2000, scoped, tag = 'input window, operand 0']
    #allocation4 [shape = 's32[2]{0}', space=sflag, size = 0x8, scoped, tag = 'scoped memory for tpu_custom_call.1']
    #allocation5 [shape = 's32[2]{0}', space=sflag, size = 0x8, scoped, tag = 'scoped memory for tpu_custom_call.1']
    #allocation6 [shape = 'u8[8192]{0}', space=vmem, size = 0x2000, scoped, tag = 'input window, operand 1']
    #allocation7 [shape = 's32[2]{0}', space=sflag, size = 0x8, scoped, tag = 'scoped memory for tpu_custom_call.1']
    #allocation8 [shape = 'u8[65536]{0}', space=vmem, size = 0x10000, scoped, tag = 'input window, operand 2']
    #allocation9 [shape = 'u8[4096]{0}', space=vmem, size = 0x1000, scoped, tag = 'input window, operand 3, single buffered']
    #allocation10 [shape = 's32[1]{0}', space=sflag, size = 0x4, scoped, tag = 'scoped memory for tpu_custom_call.1']
    #allocation11 [shape = 'u8[32768]{0}', space=vmem, size = 0x8000, scoped, tag = 'input window, operand 4, single buffered']
    #allocation12 [shape = 'u8[8192]{0}', space=vmem, size = 0x2000, scoped, tag = 'input window, operand 6, single buffered']
    #allocation13 [shape = 's32[1]{0}', space=sflag, size = 0x4, scoped, tag = 'scoped memory for tpu_custom_call.1']
    #allocation14 [shape = 'u8[8192]{0}', space=vmem, size = 0x2000, scoped, tag = 'output window, operand 0, single buffered']
    %12 = vsyncpa [#allocation4], 0
    %s13 = scalar_lea.sflag [#allocation4], 1
    %14 = vsyncpa %s13, 0
    %15 = vsyncpa [#allocation7], 0
    %s16 = scalar_lea.sflag [#allocation7], 1
    %17 = vsyncpa %s16, 0
    %18 = vsyncpa [#allocation10], 0
    %19 = vsyncpa [#allocation13], 0
    %20 = vsyncpa [#allocation5], 0
    loop: start=0, step=1, limit=4
    $region2: #{tpu_custom_call.1} parent=1 // loop_pre_header
      _
    $region3: #{tpu_custom_call.1} parent=1 // loop_header
      %s22 = sphi 0, %s26
      %p23 = scmp.ge.s32.totalorder %s22, 4
      %s29 = sphi 0, %s41
      %s30 = sphi 0, %s37
      %s31 = sphi 0, %s29
      %s32 = sphi 0, %s30
      %s33 = sphi 0, %s31
      %s34 = sphi 0, %s32
      %s46 = sphi 0, %s48
      %s49 = sphi 0, %s46
      %s50 = sphi 0, %s49
      %s66 = sphi 0, %s50
      %s72 = sphi 0, %s74
      %s75 = sphi 0, %s72
      %s76 = sphi 0, %s75
      %s92 = sphi 0, %s76
      %s98 = sphi 0, %s100
      %s101 = sphi 0, %s98
      %s102 = sphi 0, %s101
      %s118 = sphi 0, %s102
      %s124 = sphi 0, %s126
      %s127 = sphi 0, %s124
      %s128 = sphi 0, %s127
      %s144 = sphi 0, %s128
      %s148 = sphi 0, %s148
      %s150 = sphi 0, %s148
      %s151 = sphi 0, %s150
      %s165 = sphi 0, %s151
      %s169 = sphi 0, %s169
      %s171 = sphi 0, %s169
      %s172 = sphi 0, %s171
      %s186 = sphi 0, %s172
      %s192 = sphi 0, %s194
      %s195 = sphi 0, %s192
      %s196 = sphi 0, %s195
      %s212 = sphi 0, %s196
      %s218 = sphi 0, %s220
      %s221 = sphi 0, %s218
      %s222 = sphi 0, %s221
      %s238 = sphi 0, %s222
    $region4: #{tpu_custom_call.1} parent=1 // loop_header_branch
      %25 = sbr.rel (%p23) target = $region8
    $region5: #{tpu_custom_call.1} parent=1 // loop_body
      %s27 = ssub.s32 %s22, 1
      %s28 = ssub.s32 %s22, 2
      %s35 = sadd.s32 1, %s30
      %p36 = scmp.ge.s32.totalorder %s35, 2
      %s37 = scalar_select %p36, 0, %s35
      %s38 = sadd.s32 1, %s29
      %s39 = scalar_select %p36, %s38, %s29
      %p40 = scmp.ge.s32.totalorder %s39, 1
      %s41 = scalar_select %p40, 0, %s39
      %s42 = ssub.s32 %s30, %s37
      %s43 = ssub.s32 %s29, %s41
      %s44 = sor.u32 %s42, %s43
      %p45 = scmp.eq.s32.totalorder %s44, 0
      %s47 = sadd.s32 %s46, 1
      %s48 = scalar_select %p45, %s46, %s47
      %p51 = pneg %p45
      %p52 = scmp.eq.s32.totalorder %s22, 1
      %p53 = por %p51, %p52
      %p54 = scmp.ne.s32.totalorder %s46, %s49
      %p55 = scmp.eq.s32.totalorder %s22, 0
      %p56 = por %p54, %p55
      %p57 = scmp.ne.s32.totalorder %s46, %s49
      %p58 = scmp.eq.s32.totalorder %s27, 1
      %p59 = por %p57, %p58
      %p60 = scmp.ne.s32.totalorder %s49, %s50
      %p61 = scmp.eq.s32.totalorder %s27, 0
      %p62 = por %p60, %p61
      %p63 = scmp.ne.s32.totalorder %s49, %s50
      %p64 = scmp.eq.s32.totalorder %s28, 1
      %p65 = por %p63, %p64
      %p67 = scmp.ne.s32.totalorder %s50, %s66
      %p68 = scmp.eq.s32.totalorder %s28, 0
      %p69 = por %p67, %p68
      %s70 = ssub.s32 %s30, %s37
      %p71 = scmp.eq.s32.totalorder %s70, 0
      %s73 = sadd.s32 %s72, 1
      %s74 = scalar_select %p71, %s72, %s73
      %p77 = pneg %p71
      %p78 = scmp.eq.s32.totalorder %s22, 1
      %p79 = por %p77, %p78
      %p80 = scmp.ne.s32.totalorder %s72, %s75
      %p81 = scmp.eq.s32.totalorder %s22, 0
      %p82 = por %p80, %p81
      %p83 = scmp.ne.s32.totalorder %s72, %s75
      %p84 = scmp.eq.s32.totalorder %s27, 1
      %p85 = por %p83, %p84
      %p86 = scmp.ne.s32.totalorder %s75, %s76
      %p87 = scmp.eq.s32.totalorder %s27, 0
      %p88 = por %p86, %p87
      %p89 = scmp.ne.s32.totalorder %s75, %s76
      %p90 = scmp.eq.s32.totalorder %s28, 1
      %p91 = por %p89, %p90
      %p93 = scmp.ne.s32.totalorder %s76, %s92
      %p94 = scmp.eq.s32.totalorder %s28, 0
      %p95 = por %p93, %p94
      %s96 = ssub.s32 %s30, %s37
      %p97 = scmp.eq.s32.totalorder %s96, 0
      %s99 = sadd.s32 %s98, 1
      %s100 = scalar_select %p97, %s98, %s99
      %p103 = pneg %p97
      %p104 = scmp.eq.s32.totalorder %s22, 1
      %p105 = por %p103, %p104
      %p106 = scmp.ne.s32.totalorder %s98, %s101
      %p107 = scmp.eq.s32.totalorder %s22, 0
      %p108 = por %p106, %p107
      %p109 = scmp.ne.s32.totalorder %s98, %s101
      %p110 = scmp.eq.s32.totalorder %s27, 1
      %p111 = por %p109, %p110
      %p112 = scmp.ne.s32.totalorder %s101, %s102
      %p113 = scmp.eq.s32.totalorder %s27, 0
      %p114 = por %p112, %p113
      %p115 = scmp.ne.s32.totalorder %s101, %s102
      %p116 = scmp.eq.s32.totalorder %s28, 1
      %p117 = por %p115, %p116
      %p119 = scmp.ne.s32.totalorder %s102, %s118
      %p120 = scmp.eq.s32.totalorder %s28, 0
      %p121 = por %p119, %p120
      %s122 = ssub.s32 %s29, %s41
      %p123 = scmp.eq.s32.totalorder %s122, 0
      %s125 = sadd.s32 %s124, 1
      %s126 = scalar_select %p123, %s124, %s125
      %p129 = pneg %p123
      %p130 = scmp.eq.s32.totalorder %s22, 1
      %p131 = por %p129, %p130
      %p132 = scmp.ne.s32.totalorder %s124, %s127
      %p133 = scmp.eq.s32.totalorder %s22, 0
      %p134 = por %p132, %p133
      %p135 = scmp.ne.s32.totalorder %s124, %s127
      %p136 = scmp.eq.s32.totalorder %s27, 1
      %p137 = por %p135, %p136
      %p138 = scmp.ne.s32.totalorder %s127, %s128
      %p139 = scmp.eq.s32.totalorder %s27, 0
      %p140 = por %p138, %p139
      %p141 = scmp.ne.s32.totalorder %s127, %s128
      %p142 = scmp.eq.s32.totalorder %s28, 1
      %p143 = por %p141, %p142
      %p145 = scmp.ne.s32.totalorder %s128, %s144
      %p146 = scmp.eq.s32.totalorder %s28, 0
      %p147 = por %p145, %p146
      %s149 = sadd.s32 %s148, 1
      %p152 = scmp.eq.s32.totalorder %s22, 1
      %p153 = scmp.ne.s32.totalorder %s148, %s150
      %p154 = scmp.eq.s32.totalorder %s22, 0
      %p155 = por %p153, %p154
      %p156 = scmp.ne.s32.totalorder %s148, %s150
      %p157 = scmp.eq.s32.totalorder %s27, 1
      %p158 = por %p156, %p157
      %p159 = scmp.ne.s32.totalorder %s150, %s151
      %p160 = scmp.eq.s32.totalorder %s27, 0
      %p161 = por %p159, %p160
      %p162 = scmp.ne.s32.totalorder %s150, %s151
      %p163 = scmp.eq.s32.totalorder %s28, 1
      %p164 = por %p162, %p163
      %p166 = scmp.ne.s32.totalorder %s151, %s165
      %p167 = scmp.eq.s32.totalorder %s28, 0
      %p168 = por %p166, %p167
      %s170 = sadd.s32 %s169, 1
      %p173 = scmp.eq.s32.totalorder %s22, 1
      %p174 = scmp.ne.s32.totalorder %s169, %s171
      %p175 = scmp.eq.s32.totalorder %s22, 0
      %p176 = por %p174, %p175
      %p177 = scmp.ne.s32.totalorder %s169, %s171
      %p178 = scmp.eq.s32.totalorder %s27, 1
      %p179 = por %p177, %p178
      %p180 = scmp.ne.s32.totalorder %s171, %s172
      %p181 = scmp.eq.s32.totalorder %s27, 0
      %p182 = por %p180, %p181
      %p183 = scmp.ne.s32.totalorder %s171, %s172
      %p184 = scmp.eq.s32.totalorder %s28, 1
      %p185 = por %p183, %p184
      %p187 = scmp.ne.s32.totalorder %s172, %s186
      %p188 = scmp.eq.s32.totalorder %s28, 0
      %p189 = por %p187, %p188
      %s190 = ssub.s32 %s29, %s41
      %p191 = scmp.eq.s32.totalorder %s190, 0
      %s193 = sadd.s32 %s192, 1
      %s194 = scalar_select %p191, %s192, %s193
      %p197 = pneg %p191
      %p198 = scmp.eq.s32.totalorder %s22, 1
      %p199 = por %p197, %p198
      %p200 = scmp.ne.s32.totalorder %s192, %s195
      %p201 = scmp.eq.s32.totalorder %s22, 0
      %p202 = por %p200, %p201
      %p203 = scmp.ne.s32.totalorder %s192, %s195
      %p204 = scmp.eq.s32.totalorder %s27, 1
      %p205 = por %p203, %p204
      %p206 = scmp.ne.s32.totalorder %s195, %s196
      %p207 = scmp.eq.s32.totalorder %s27, 0
      %p208 = por %p206, %p207
      %p209 = scmp.ne.s32.totalorder %s195, %s196
      %p210 = scmp.eq.s32.totalorder %s28, 1
      %p211 = por %p209, %p210
      %p213 = scmp.ne.s32.totalorder %s196, %s212
      %p214 = scmp.eq.s32.totalorder %s28, 0
      %p215 = por %p213, %p214
      %s216 = ssub.s32 %s29, %s41
      %p217 = scmp.eq.s32.totalorder %s216, 0
      %s219 = sadd.s32 %s218, 1
      %s220 = scalar_select %p217, %s218, %s219
      %p223 = pneg %p217
      %p224 = scmp.eq.s32.totalorder %s22, 1
      %p225 = por %p223, %p224
      %p226 = scmp.ne.s32.totalorder %s218, %s221
      %p227 = scmp.eq.s32.totalorder %s22, 0
      %p228 = por %p226, %p227
      %p229 = scmp.ne.s32.totalorder %s218, %s221
      %p230 = scmp.eq.s32.totalorder %s27, 1
      %p231 = por %p229, %p230
      %p232 = scmp.ne.s32.totalorder %s221, %s222
      %p233 = scmp.eq.s32.totalorder %s27, 0
      %p234 = por %p232, %p233
      %p235 = scmp.ne.s32.totalorder %s221, %s222
      %p236 = scmp.eq.s32.totalorder %s28, 1
      %p237 = por %p235, %p236
      %p239 = scmp.ne.s32.totalorder %s222, %s238
      %p240 = scmp.eq.s32.totalorder %s28, 0
      %p241 = por %p239, %p240
      %p242 = scmp.le.s32.totalorder 1, %s22
      %p243 = scmp.lt.s32.totalorder %s22, 3
      %p244 = pnand %p242, %p243
      %p245 = pneg %p244
      // Predicated region
      $region9: #{tpu_custom_call.1} parent=5 // pred_check
        _
      $region10: #{tpu_custom_call.1} parent=5 // pred_check_branch
        %247 = sbr.rel (%p244) target = $region12
      $region11: #{tpu_custom_call.1} parent=5 // pred_region
        %s248 = ssub.s32 %s22, 1
        // Predicated region
        $region13: #{tpu_custom_call.1} parent=11 // pred_check
          %p249 = pneg %p140
        $region14: #{tpu_custom_call.1} parent=11 // pred_check_branch
          %251 = sbr.rel (%p249) target = $region16
        $region15: #{tpu_custom_call.1} parent=11 // pred_region
          %s252 = smul.u32 2, %s31
          %254 = vsyncadd [#allocation10], 0
          %s255 = smul.addr %s252, 4
          %s256 = scalar_lea.hbm %s3, %s255
          %s257 = sshll.u32 %s256, 4
          %s258 = int_to_ptr.hbm [resolvable:$true] %s257
          %s259 = sshll.u32 [#allocation9], 4
          %s260 = int_to_ptr.vmem [resolvable:$true] %s259
          %265 = dma.hbm_to_vmem [thread:$0]  %s258, 128, %s260, [#allocation10], 64, 64, 4
        $region16: #{tpu_custom_call.1} parent=11 // pred_fallthru
          _
        // Predicated region
        $region17: #{tpu_custom_call.1} parent=11 // pred_check
          %p266 = pneg %p161
        $region18: #{tpu_custom_call.1} parent=11 // pred_check_branch
          %268 = sbr.rel (%p266) target = $region20
        $region19: #{tpu_custom_call.1} parent=11 // pred_region
          %270 = vsyncadd [#allocation10], 0
          %s271 = sshll.u32 %s4, 4
          %s272 = int_to_ptr.hbm [resolvable:$true] %s271
          %s273 = sshll.u32 [#allocation11], 4
          %s274 = int_to_ptr.vmem [resolvable:$true] %s273
          %279 = dma.hbm_to_vmem [thread:$0]  %s272, 1024, %s274, [#allocation10], 64, 64, 4
        $region20: #{tpu_custom_call.1} parent=11 // pred_fallthru
          _
        // Predicated region
        $region21: #{tpu_custom_call.1} parent=11 // pred_check
          %p280 = pneg %p182
        $region22: #{tpu_custom_call.1} parent=11 // pred_check_branch
          %282 = sbr.rel (%p280) target = $region24
        $region23: #{tpu_custom_call.1} parent=11 // pred_region
          _
        $region24: #{tpu_custom_call.1} parent=11 // pred_fallthru
          _
        // Predicated region
        $region25: #{tpu_custom_call.1} parent=11 // pred_check
          %p283 = pneg %p208
        $region26: #{tpu_custom_call.1} parent=11 // pred_check_branch
          %285 = sbr.rel (%p283) target = $region28
        $region27: #{tpu_custom_call.1} parent=11 // pred_region
          %s286 = smul.u32 2, %s31
          %288 = vsyncadd [#allocation13], 0
          %s289 = smul.addr %s286, 8
          %s290 = scalar_lea.hbm %s6, %s289
          %s291 = sshll.u32 %s290, 4
          %s292 = int_to_ptr.hbm [resolvable:$true] %s291
          %s293 = sshll.u32 [#allocation12], 4
          %s294 = int_to_ptr.vmem [resolvable:$true] %s293
          %299 = dma.hbm_to_vmem [thread:$0]  %s292, 256, %s294, [#allocation13], 128, 128, 8
        $region28: #{tpu_custom_call.1} parent=11 // pred_fallthru
          _
      $region12: #{tpu_custom_call.1} parent=5 // pred_fallthru
        _
      %p300 = scmp.lt.s32.totalorder %s22, 2
      // Predicated region
      $region29: #{tpu_custom_call.1} parent=5 // pred_check
        %p301 = pneg %p300
      $region30: #{tpu_custom_call.1} parent=5 // pred_check_branch
        %303 = sbr.rel (%p301) target = $region32
      $region31: #{tpu_custom_call.1} parent=5 // pred_region
        // Predicated region
        $region33: #{tpu_custom_call.1} parent=31 // pred_check
          %p304 = pneg %p56
        $region34: #{tpu_custom_call.1} parent=31 // pred_check_branch
          %306 = sbr.rel (%p304) target = $region36
        $region35: #{tpu_custom_call.1} parent=31 // pred_region
          %s307 = sand.u32 %s46, 1
          %s308 = scalar_lea.sflag [#allocation4], %s307
          %s309 = sand.u32 %s46, 1
          %s310 = smul.addr %s309, 8
          %s311 = scalar_lea.vmem [#allocation3], %s310
          %s312 = smul.u32 2, %s29
          %314 = vsyncadd %s308, 0
          %s315 = smul.addr %s30, 2
          %s316 = sadd.s32 %s312, %s315
          %s317 = smul.addr %s316, 4
          %s318 = scalar_lea.hbm %s0, %s317
          %s319 = sshll.u32 %s318, 4
          %s320 = int_to_ptr.hbm [resolvable:$true] %s319
          %s321 = sshll.u32 %s311, 4
          %s322 = int_to_ptr.vmem [resolvable:$true] %s321
          %327 = dma.hbm_to_vmem [thread:$0]  %s320, 128, %s322, %s308, 64, 64, 4
        $region36: #{tpu_custom_call.1} parent=31 // pred_fallthru
          _
        // Predicated region
        $region37: #{tpu_custom_call.1} parent=31 // pred_check
          %p328 = pneg %p82
        $region38: #{tpu_custom_call.1} parent=31 // pred_check_branch
          %330 = sbr.rel (%p328) target = $region40
        $region39: #{tpu_custom_call.1} parent=31 // pred_region
          %s331 = sand.u32 %s22, 1
          %s332 = scalar_lea.sflag [#allocation7], %s331
          %s333 = sand.u32 %s72, 1
          %s334 = smul.addr %s333, 8
          %s335 = scalar_lea.vmem [#allocation6], %s334
          %337 = vsyncadd %s332, 0
          %s338 = smul.addr %s30, 2
          %s339 = smul.addr %s338, 4
          %s340 = scalar_lea.hbm %s1, %s339
          %s341 = sshll.u32 %s340, 4
          %s342 = int_to_ptr.hbm [resolvable:$true] %s341
          %s343 = sshll.u32 %s335, 4
          %s344 = int_to_ptr.vmem [resolvable:$true] %s343
          %349 = dma.hbm_to_vmem [thread:$0]  %s342, 128, %s344, %s332, 64, 64, 4
        $region40: #{tpu_custom_call.1} parent=31 // pred_fallthru
          _
        // Predicated region
        $region41: #{tpu_custom_call.1} parent=31 // pred_check
          %p350 = pneg %p108
        $region42: #{tpu_custom_call.1} parent=31 // pred_check_branch
          %352 = sbr.rel (%p350) target = $region44
        $region43: #{tpu_custom_call.1} parent=31 // pred_region
          %s353 = sand.u32 %s22, 1
          %s354 = scalar_lea.sflag [#allocation7], %s353
          %s355 = sand.u32 %s98, 1
          %s356 = smul.addr %s355, 64
          %s357 = scalar_lea.vmem [#allocation8], %s356
          %359 = vsyncadd %s354, 0
          %s360 = smul.addr %s30, 16
          %s361 = smul.addr %s360, 4
          %s362 = scalar_lea.hbm %s2, %s361
          %s363 = sshll.u32 %s362, 4
          %s364 = int_to_ptr.hbm [resolvable:$true] %s363
          %s365 = sshll.u32 %s357, 4
          %s366 = int_to_ptr.vmem [resolvable:$true] %s365
          %371 = dma.hbm_to_vmem [thread:$0]  %s364, 1024, %s366, %s354, 64, 64, 4
        $region44: #{tpu_custom_call.1} parent=31 // pred_fallthru
          _
      $region32: #{tpu_custom_call.1} parent=5 // pred_fallthru
        _
      %p372 = scmp.le.s32.totalorder 1, %s22
      %p373 = scmp.lt.s32.totalorder %s22, 3
      %p374 = pnand %p372, %p373
      %p375 = pneg %p374
      // Predicated region
      $region45: #{tpu_custom_call.1} parent=5 // pred_check
        _
      $region46: #{tpu_custom_call.1} parent=5 // pred_check_branch
        %377 = sbr.rel (%p374) target = $region48
      $region47: #{tpu_custom_call.1} parent=5 // pred_region
        %s378 = ssub.s32 %s22, 1
        %s379 = sand.u32 %s49, 1
        %s380 = scalar_lea.sflag [#allocation4], %s379
        %s381 = sand.u32 %s49, 1
        %s382 = smul.addr %s381, 8
        %s383 = scalar_lea.vmem [#allocation3], %s382
        // Predicated region
        $region49: #{tpu_custom_call.1} parent=47 // pred_check
          %p384 = pneg %p62
        $region50: #{tpu_custom_call.1} parent=47 // pred_check_branch
          %386 = sbr.rel (%p384) target = $region52
        $region51: #{tpu_custom_call.1} parent=47 // pred_region
          %388 = dma.done %s380, 128
        $region52: #{tpu_custom_call.1} parent=47 // pred_fallthru
          _
        %s389 = sand.u32 %s27, 1
        %s390 = scalar_lea.sflag [#allocation7], %s389
        %s391 = sand.u32 %s75, 1
        %s392 = smul.addr %s391, 8
        %s393 = scalar_lea.vmem [#allocation6], %s392
        // Predicated region
        $region53: #{tpu_custom_call.1} parent=47 // pred_check
          %p394 = pneg %p88
        $region54: #{tpu_custom_call.1} parent=47 // pred_check_branch
          %396 = sbr.rel (%p394) target = $region56
        $region55: #{tpu_custom_call.1} parent=47 // pred_region
          %398 = dma.done %s390, 128
        $region56: #{tpu_custom_call.1} parent=47 // pred_fallthru
          _
        %s399 = sand.u32 %s27, 1
        %s400 = scalar_lea.sflag [#allocation7], %s399
        %s401 = sand.u32 %s101, 1
        %s402 = smul.addr %s401, 64
        %s403 = scalar_lea.vmem [#allocation8], %s402
        // Predicated region
        $region57: #{tpu_custom_call.1} parent=47 // pred_check
          %p404 = pneg %p114
        $region58: #{tpu_custom_call.1} parent=47 // pred_check_branch
          %406 = sbr.rel (%p404) target = $region60
        $region59: #{tpu_custom_call.1} parent=47 // pred_region
          %408 = dma.done %s400, 1024
        $region60: #{tpu_custom_call.1} parent=47 // pred_fallthru
          _
        // Predicated region
        $region61: #{tpu_custom_call.1} parent=47 // pred_check
          %p409 = pneg %p140
        $region62: #{tpu_custom_call.1} parent=47 // pred_check_branch
          %411 = sbr.rel (%p409) target = $region64
        $region63: #{tpu_custom_call.1} parent=47 // pred_region
          %413 = dma.done [#allocation10], 128
        $region64: #{tpu_custom_call.1} parent=47 // pred_fallthru
          _
        // Predicated region
        $region65: #{tpu_custom_call.1} parent=47 // pred_check
          %p414 = pneg %p161
        $region66: #{tpu_custom_call.1} parent=47 // pred_check_branch
          %416 = sbr.rel (%p414) target = $region68
        $region67: #{tpu_custom_call.1} parent=47 // pred_region
          %418 = dma.done [#allocation10], 1024
        $region68: #{tpu_custom_call.1} parent=47 // pred_fallthru
          _
        // Predicated region
        $region69: #{tpu_custom_call.1} parent=47 // pred_check
          %p419 = pneg %p208
        $region70: #{tpu_custom_call.1} parent=47 // pred_check_branch
          %421 = sbr.rel (%p419) target = $region72
        $region71: #{tpu_custom_call.1} parent=47 // pred_region
          %423 = dma.done [#allocation13], 256
        $region72: #{tpu_custom_call.1} parent=47 // pred_fallthru
          _
        %s424 = sand.u32 %s49, 1
        %s425 = scalar_lea.sflag [#allocation4], %s424
        %s426 = sand.u32 %s49, 1
        %s427 = smul.addr %s426, 8
        %s428 = scalar_lea.vmem [#allocation3], %s427
        %p429 = pneg %p62
        %p430 = pneg %p59
        %s431 = sand.u32 %s27, 1
        %s432 = scalar_lea.sflag [#allocation7], %s431
        %s433 = sand.u32 %s75, 1
        %s434 = smul.addr %s433, 8
        %s435 = scalar_lea.vmem [#allocation6], %s434
        %p436 = pneg %p88
        %p437 = pneg %p85
        %s438 = sand.u32 %s27, 1
        %s439 = scalar_lea.sflag [#allocation7], %s438
        %s440 = sand.u32 %s101, 1
        %s441 = smul.addr %s440, 64
        %s442 = scalar_lea.vmem [#allocation8], %s441
        %p443 = pneg %p114
        %p444 = pneg %p111
        %p445 = pneg %p140
        %p446 = pneg %p137
        %p447 = pneg %p161
        %p448 = pneg %p158
        %p449 = pneg %p182
        %p450 = pneg %p179
        %p451 = pneg %p208
        %p452 = pneg %p205
        %p453 = pneg %p234
        %p454 = pneg %p231
        %s455 = smul.u32 2, %s31
        %s456 = smul.u32 2, %s31
        %s457 = smul.u32 2, %s31
        %s458 = smul.u32 2, %s31
        %p460 = scmp.eq.s32.totalorder %s32, 0
        // Predicated region
        $region73: #{tpu_custom_call.1} parent=47 // pred_check
          %p461 = pneg %p460
        $region74: #{tpu_custom_call.1} parent=47 // pred_check_branch
          %463 = sbr.rel (%p461) target = $region76
        $region75: #{tpu_custom_call.1} parent=47 // pred_region
          %v464 = vld [vmem:[#allocation9] sm:$0xf]
          %v465 = vld [vmem:[#allocation9 + $0x4] sm:$0xf]
          %v466 = vld [vmem:[#allocation11] sm:$0xf]
          %v467 = vld [vmem:[#allocation11 + $0x4] sm:$0xf]
          %v468 = vld [vmem:[#allocation11 + $0x8] sm:$0xf]
          %v469 = vld [vmem:[#allocation11 + $0xc] sm:$0xf]
          %v470 = vld [vmem:[#allocation11 + $0x10] sm:$0xf]
          %v471 = vld [vmem:[#allocation11 + $0x14] sm:$0xf]
          %v472 = vld [vmem:[#allocation11 + $0x18] sm:$0xf]
          %v473 = vld [vmem:[#allocation11 + $0x1c] sm:$0xf]
          %v474 = vld [vmem:[#allocation11 + $0x20] sm:$0xf]
          %v475 = vld [vmem:[#allocation11 + $0x24] sm:$0xf]
          %v476 = vld [vmem:[#allocation11 + $0x28] sm:$0xf]
          %v477 = vld [vmem:[#allocation11 + $0x2c] sm:$0xf]
          %v478 = vld [vmem:[#allocation11 + $0x30] sm:$0xf]
          %v479 = vld [vmem:[#allocation11 + $0x34] sm:$0xf]
          %v480 = vld [vmem:[#allocation11 + $0x38] sm:$0xf]
          %v481 = vld [vmem:[#allocation11 + $0x3c] sm:$0xf]
          %v482 = vld [vmem:[%s5] sm:$0x1]
          %v484 = vperm.slane %v482, 0
          %v488 = vunpack.c.l.b16 %v464
          %v489 = vunpack.c.l.b16 %v465
          %v490 = vpack.c.b16 %v489, %v488
          %v508 = vunpack.c.l.b16 %v466
          %v509 = vunpack.c.l.b16 %v467
          %v510 = vunpack.c.l.b16 %v468
          %v511 = vunpack.c.l.b16 %v469
          %v512 = vunpack.c.l.b16 %v470
          %v513 = vunpack.c.l.b16 %v471
          %v514 = vunpack.c.l.b16 %v472
          %v515 = vunpack.c.l.b16 %v473
          %v516 = vunpack.c.l.b16 %v474
          %v517 = vunpack.c.l.b16 %v475
          %v518 = vunpack.c.l.b16 %v476
          %v519 = vunpack.c.l.b16 %v477
          %v520 = vunpack.c.l.b16 %v478
          %v521 = vunpack.c.l.b16 %v479
          %v522 = vunpack.c.l.b16 %v480
          %v523 = vunpack.c.l.b16 %v481
          %v524 = vpack.c.b16 %v509, %v508
          %v525 = vpack.c.b16 %v511, %v510
          %v526 = vpack.c.b16 %v513, %v512
          %v527 = vpack.c.b16 %v515, %v514
          %v528 = vpack.c.b16 %v517, %v516
          %v529 = vpack.c.b16 %v519, %v518
          %v530 = vpack.c.b16 %v521, %v520
          %v531 = vpack.c.b16 %v523, %v522
          %540 = vmatpush.bf16.msra.mxu0 %v531
          %541 = vmatpush.bf16.msra.mxu0 %v530
          %542 = vmatpush.bf16.msra.mxu0 %v529
          %543 = vmatpush.bf16.msra.mxu0 %v528
          %544 = vmatpush.bf16.msra.mxu0 %v527
          %545 = vmatpush.bf16.msra.mxu0 %v526
          %546 = vmatpush.bf16.msra.mxu0 %v525
          %547 = vmatpush.bf16.msra.mxu0 %v524
          %548 = vmatmul.bf16.gmra.mxu0 %v490
          %v549 = vpop.f32.mrf.mxu0
          %v550 = vadd.f32 %v484, %v549
          %v551 = vpop.f32.mrf.mxu0
          %v552 = vadd.f32 %v484, %v551
          %553 = vdwg.mxu0
          %554 = vst [vmem:[#allocation2] sm:$0xff] %v550
          %555 = vst [vmem:[#allocation2 + $0x8] sm:$0xff] %v552
        $region76: #{tpu_custom_call.1} parent=47 // pred_fallthru
          _
        %v556 = vld [vmem:[%s393] sm:$0xf]
        %v557 = vld [vmem:[%s393 + $0x4] sm:$0xf]
        %v558 = vld [vmem:[%s403] sm:$0xf]
        %v559 = vld [vmem:[%s403 + $0x4] sm:$0xf]
        %v560 = vld [vmem:[%s403 + $0x8] sm:$0xf]
        %v561 = vld [vmem:[%s403 + $0xc] sm:$0xf]
        %v562 = vld [vmem:[%s403 + $0x10] sm:$0xf]
        %v563 = vld [vmem:[%s403 + $0x14] sm:$0xf]
        %v564 = vld [vmem:[%s403 + $0x18] sm:$0xf]
        %v565 = vld [vmem:[%s403 + $0x1c] sm:$0xf]
        %v566 = vld [vmem:[%s403 + $0x20] sm:$0xf]
        %v567 = vld [vmem:[%s403 + $0x24] sm:$0xf]
        %v568 = vld [vmem:[%s403 + $0x28] sm:$0xf]
        %v569 = vld [vmem:[%s403 + $0x2c] sm:$0xf]
        %v570 = vld [vmem:[%s403 + $0x30] sm:$0xf]
        %v571 = vld [vmem:[%s403 + $0x34] sm:$0xf]
        %v572 = vld [vmem:[%s403 + $0x38] sm:$0xf]
        %v573 = vld [vmem:[%s403 + $0x3c] sm:$0xf]
        %v576 = vunpack.c.l.b16 %v556
        %v577 = vunpack.c.l.b16 %v557
        %v578 = vpack.c.b16 %v577, %v576
        %v596 = vunpack.c.l.b16 %v558
        %v597 = vunpack.c.l.b16 %v559
        %v598 = vunpack.c.l.b16 %v560
        %v599 = vunpack.c.l.b16 %v561
        %v600 = vunpack.c.l.b16 %v562
        %v601 = vunpack.c.l.b16 %v563
        %v602 = vunpack.c.l.b16 %v564
        %v603 = vunpack.c.l.b16 %v565
        %v604 = vunpack.c.l.b16 %v566
        %v605 = vunpack.c.l.b16 %v567
        %v606 = vunpack.c.l.b16 %v568
        %v607 = vunpack.c.l.b16 %v569
        %v608 = vunpack.c.l.b16 %v570
        %v609 = vunpack.c.l.b16 %v571
        %v610 = vunpack.c.l.b16 %v572
        %v611 = vunpack.c.l.b16 %v573
        %v612 = vpack.c.b16 %v597, %v596
        %v613 = vpack.c.b16 %v599, %v598
        %v614 = vpack.c.b16 %v601, %v600
        %v615 = vpack.c.b16 %v603, %v602
        %v616 = vpack.c.b16 %v605, %v604
        %v617 = vpack.c.b16 %v607, %v606
        %v618 = vpack.c.b16 %v609, %v608
        %v619 = vpack.c.b16 %v611, %v610
        %628 = vmatpush.bf16.msra.mxu0 %v619
        %629 = vmatpush.bf16.msra.mxu0 %v618
        %630 = vmatpush.bf16.msra.mxu0 %v617
        %631 = vmatpush.bf16.msra.mxu0 %v616
        %632 = vmatpush.bf16.msra.mxu0 %v615
        %633 = vmatpush.bf16.msra.mxu0 %v614
        %634 = vmatpush.bf16.msra.mxu0 %v613
        %635 = vmatpush.bf16.msra.mxu0 %v612
        %636 = vmatmul.bf16.gmra.mxu0 %v578
        %v637 = vpop.f32.mrf.mxu0
        %v638 = vadd.f32 0.0, %v637
        %v639 = vpop.f32.mrf.mxu0
        %v640 = vadd.f32 0.0, %v639
        %641 = vdwg.mxu0
        %v642 = vld [vmem:[#allocation2] sm:$0xff]
        %v643 = vld [vmem:[#allocation2 + $0x8] sm:$0xff]
        %v644 = vld [vmem:[%s383] sm:$0xf]
        %v645 = vld [vmem:[%s383 + $0x4] sm:$0xf]
        %v646 = vpack.c.bf16 %v640, %v638
        %v649 = vunpack.c.l.b16 %v644
        %v650 = vunpack.c.l.b16 %v645
        %v651 = vpack.c.b16 %v650, %v649
        %vm652 = vcmask 130048
        %v654 = vsel %vm652, %v651, 0
        %656 = vmatpush.bf16.msra.mxu0 0
        %657 = vmatpush.bf16.msra.mxu0 0
        %658 = vmatpush.bf16.msra.mxu0 0
        %659 = vmatpush.bf16.msra.mxu0 0
        %660 = vmatpush.bf16.msra.mxu0 0
        %661 = vmatpush.bf16.msra.mxu0 0
        %662 = vmatpush.bf16.msra.mxu0 0
        %663 = vmatpush.bf16.msra.mxu0 %v646
        %664 = vmatmul.bf16.gmra.mxu0 %v654
        %v665 = vpop.f32.mrf.mxu0
        %v666 = vadd.f32 0.0, %v665
        %v667 = vpop.f32.mrf.mxu0
        %v668 = vadd.f32 0.0, %v667
        %669 = vdwg.mxu0
        %v670 = vadd.f32 %v642, %v666
        %v671 = vadd.f32 %v643, %v668
        %672 = vst [vmem:[#allocation2] sm:$0xff] %v670
        %673 = vst [vmem:[#allocation2 + $0x8] sm:$0xff] %v671
        %p674 = scmp.eq.s32.totalorder %s32, 1
        // Predicated region
        $region77: #{tpu_custom_call.1} parent=47 // pred_check
          %p675 = pneg %p674
        $region78: #{tpu_custom_call.1} parent=47 // pred_check_branch
          %677 = sbr.rel (%p675) target = $region80
        $region79: #{tpu_custom_call.1} parent=47 // pred_region
          %v678 = vld [vmem:[#allocation2] sm:$0xff]
          %v679 = vld [vmem:[#allocation2 + $0x8] sm:$0xff]
          %v680 = vmax.f32 %v678, 0.0
          %v681 = vmax.f32 %v679, 0.0
          %v682 = vld [vmem:[#allocation12] sm:$0xff]
          %v683 = vld [vmem:[#allocation12 + $0x8] sm:$0xff]
          %v684 = vadd.s32 %v682, 2147483648
          %vm686 = vcmp.ge.s32.totalorder %v684, 3006477107
          %v687 = vadd.s32 %v683, 2147483648
          %vm689 = vcmp.ge.s32.totalorder %v687, 3006477107
          %v690 = vmul.f32 %v680, 1.25
          %v691 = vmul.f32 %v681, 1.25
          %v692 = vsel %vm686, %v690, 0.0
          %v693 = vsel %vm689, %v691, 0.0
          %694 = vst [vmem:[#allocation14] sm:$0xff] %v692
          %695 = vst [vmem:[#allocation14 + $0x8] sm:$0xff] %v693
        $region80: #{tpu_custom_call.1} parent=47 // pred_fallthru
          _
        // Predicated region
        $region81: #{tpu_custom_call.1} parent=47 // pred_check
          %p696 = pneg %p231
        $region82: #{tpu_custom_call.1} parent=47 // pred_check_branch
          %698 = sbr.rel (%p696) target = $region84
        $region83: #{tpu_custom_call.1} parent=47 // pred_region
          %s699 = smul.u32 2, %s31
          %701 = vsyncadd [#allocation5], 0
          %s702 = smul.addr %s699, 8
          %s703 = scalar_lea.hbm %s7, %s702
          %s704 = sshll.u32 [#allocation14], 4
          %s705 = int_to_ptr.vmem [resolvable:$true] %s704
          %s706 = sshll.u32 %s703, 4
          %s707 = int_to_ptr.hbm [resolvable:$true] %s706
          %712 = dma.vmem_to_hbm [thread:$0]  %s705, 256, %s707, [#allocation5], 128, 128, 8
        $region84: #{tpu_custom_call.1} parent=47 // pred_fallthru
          _
        // Predicated region
        $region85: #{tpu_custom_call.1} parent=47 // pred_check
          %p713 = pneg %p231
        $region86: #{tpu_custom_call.1} parent=47 // pred_check_branch
          %715 = sbr.rel (%p713) target = $region88
        $region87: #{tpu_custom_call.1} parent=47 // pred_region
          %717 = dma.done [#allocation5], 256
        $region88: #{tpu_custom_call.1} parent=47 // pred_fallthru
          _
      $region48: #{tpu_custom_call.1} parent=5 // pred_fallthru
        _
      %p718 = scmp.le.s32.totalorder 2, %s22
      // Predicated region
      $region89: #{tpu_custom_call.1} parent=5 // pred_check
        %p719 = pneg %p718
      $region90: #{tpu_custom_call.1} parent=5 // pred_check_branch
        %721 = sbr.rel (%p719) target = $region92
      $region91: #{tpu_custom_call.1} parent=5 // pred_region
        %s722 = ssub.s32 %s22, 2
      $region92: #{tpu_custom_call.1} parent=5 // pred_fallthru
        _
    $region6: #{tpu_custom_call.1} parent=1 // loop_footer
      %s26 = sadd.s32 1, %s22
    $region7: #{tpu_custom_call.1} parent=1 // loop_footer_branch
      %21 = sbr.rel target = $region3
    $region8: #{tpu_custom_call.1} parent=1 // loop_exit
      _
    %723 = vsyncpa [#allocation4], 1
    %s724 = scalar_lea.sflag [#allocation4], 1
    %725 = vsyncpa %s724, 1
    %726 = vsyncpa [#allocation7], 1
    %s727 = scalar_lea.sflag [#allocation7], 1
    %728 = vsyncpa %s727, 1
    %729 = vsyncpa [#allocation10], 1
    %730 = vsyncpa [#allocation13], 1
    %731 = vsyncpa [#allocation5], 1
    %s732 = scalar_lea.sflag [#allocation5], 1
    %733 = vsyncpa %s732, 1

</llo_original>
